<compile_context>
chip_gen: v7x
topology: tpu7x:2x2x1
jax: 0.10.0
libtpu: 0.0.40
codegen_flags: <defaults>
</compile_context>

<pallas_src>
import functools

import jax
import jax.numpy as jnp
from jax.experimental import pallas as pl
from jax.experimental.pallas import tpu as pltpu


def _rev_sce_kernel(x_ref, y_ref, loss_ref):
    # x_ref, y_ref: (TB, C) tiles; loss_ref: (TB, 1) per-sample losses.
    x = x_ref[...].astype(jnp.float32)

    # Numerically stable softmax along the last (lane) axis.
    m = jnp.max(x, axis=-1, keepdims=True)
    e = jnp.exp(x - m)
    denom = jnp.sum(e, axis=-1, keepdims=True)
    # EUP approximate reciprocal + one Newton step: ~f32 accuracy, and the
    # refinement runs on a tiny (TB, 1) vector so it is essentially free.
    r = pl.reciprocal(denom, approx=True)
    r = r * (2.0 - denom * r)
    pred = e * r
    # softmax output is already <= 1, so only the lower clamp is needed
    # (identical semantics to clamp(pred, 1e-7, 1.0), one fewer VPU op/elem).
    pred = jnp.maximum(pred, 1e-7)

    y = jnp.clip(y_ref[...].astype(jnp.float32), 1e-4, 1.0)
    log_y = jnp.log(y)

    # NOTE: output stays (TB, 1); write traffic is ~C x smaller than the input
    # reads, so a lane-dense relayout of the store is not worth the extra
    # in-kernel sublane->lane shuffle here.
    loss_ref[...] = -jnp.sum(log_y * pred, axis=-1, keepdims=True)


def _choose_block_b(batch, num_classes):
    """Largest safe batch tile for this mem-bound kernel.

    Keeps the f32 working tile (block_b * C * 4B) around <= 2 MiB so that the
    double-buffered input tiles plus in-kernel f32 intermediates stay well
    under the 32 MiB scoped-VMEM limit requested below (safe on v5e/v6e/v7x),
    while keeping >= 2 grid steps when the batch allows it so both v7x
    TensorCores get work via the "parallel" grid axis.
    """
    bb = (2 * 1024 * 1024) // max(1, 4 * num_classes)
    bb = int(max(8, min(1024, bb)))
    bb -= bb % 8  # sublane-aligned
    half = max(8, (((batch + 1) // 2) + 7) // 8 * 8)
    return min(bb, half)


@functools.partial(jax.jit, static_argnames=("reduction", "block_b"))
def reverse_soft_target_cross_entropy(x, y, reduction="mean", block_b=None):
    """x: [B, C] logits; y: [B, C] soft targets (f32 or bf16).

    Returns a scalar (reduction='mean') or a [B] float32 vector ('none').
    """
    B, C = x.shape
    assert y.shape == (B, C)
    if reduction not in ("mean", "none"):
        raise NotImplementedError

    bb = block_b if block_b is not None else _choose_block_b(B, C)
    # Arbitrary batch sizes: pad to a multiple of the tile instead of asserting
    # divisibility; padded rows are computed (finite, no NaNs) and discarded.
    B_pad = ((B + bb - 1) // bb) * bb
    if B_pad != B:
        pad = ((0, B_pad - B), (0, 0))
        x = jnp.pad(x, pad)
        y = jnp.pad(y, pad)

    cost = pl.CostEstimate(
        flops=int(7 * B_pad * C),
        transcendentals=int(2 * B_pad * C),  # exp + log per element
        bytes_accessed=int(
            B_pad * C * (x.dtype.itemsize + y.dtype.itemsize) + 4 * B_pad
        ),
    )

    grid = (B_pad // bb,)
    per_sample = pl.pallas_call(
        _rev_sce_kernel,
        out_shape=jax.ShapeDtypeStruct((B_pad, 1), jnp.float32),
        grid_spec=pltpu.PrefetchScalarGridSpec(
            num_scalar_prefetch=0,
            grid=grid,
            in_specs=[
                pl.BlockSpec((bb, C), lambda i: (i, 0)),
                pl.BlockSpec((bb, C), lambda i: (i, 0)),
            ],
            out_specs=pl.BlockSpec((bb, 1), lambda i: (i, 0)),
        ),
        compiler_params=pltpu.CompilerParams(
            dimension_semantics=("parallel",),
            vmem_limit_bytes=32 * 1024 * 1024,
        ),
        cost_estimate=cost,
    )(x, y)

    per_sample = per_sample[:B, 0]  # [B]
    if reduction == "mean":
        return jnp.mean(per_sample)
    return per_sample


def _reference(x, y, reduction="mean"):
    pred = jax.nn.softmax(x.astype(jnp.float32), axis=-1)
    pred = jnp.clip(pred, 1e-7, 1.0)
    yc = jnp.clip(y.astype(jnp.float32), 1e-4, 1.0)
    loss = -jnp.sum(jnp.log(yc) * pred, axis=-1)
    return jnp.mean(loss) if reduction == "mean" else loss


if __name__ == "__main__":
    key = jax.random.PRNGKey(0)
    kx, ky, kx2, ky2 = jax.random.split(key, 4)

    # Small shapes consistent with the module: batch=8, num_classes=32.
    B, C = 8, 32
    x = jax.random.normal(kx, (B, C), dtype=jnp.float32)
    # Soft targets (e.g. from MixUp): a proper probability distribution per row.
    y = jax.nn.softmax(jax.random.normal(ky, (B, C), dtype=jnp.float32), axis=-1)

    loss_mean = reverse_soft_target_cross_entropy(x, y, reduction="mean")
    loss_none = reverse_soft_target_cross_entropy(x, y, reduction="none")
    jax.block_until_ready((loss_mean, loss_none))
    assert jnp.allclose(loss_mean, _reference(x, y, "mean"), atol=1e-5, rtol=1e-5)
    assert jnp.allclose(loss_none, _reference(x, y, "none"), atol=1e-5, rtol=1e-5)

    # Non-multiple batch (exercises the padded tail) with bf16 inputs
    # (kernel upcasts internally to f32; no pre-cast in the caller).
    B2, C2 = 10, 48
    x2 = jax.random.normal(kx2, (B2, C2), dtype=jnp.float32).astype(jnp.bfloat16)
    y2 = jax.nn.softmax(
        jax.random.normal(ky2, (B2, C2), dtype=jnp.float32), axis=-1
    ).astype(jnp.bfloat16)
    loss2 = reverse_soft_target_cross_entropy(x2, y2, reduction="none")
    jax.block_until_ready(loss2)
    assert loss2.shape == (B2,)
    assert jnp.allclose(loss2, _reference(x2, y2, "none"), atol=1e-4, rtol=1e-4)

    loss2_mean = reverse_soft_target_cross_entropy(x2, y2, reduction="mean")
    jax.block_until_ready(loss2_mean)
    assert jnp.allclose(loss2_mean, _reference(x2, y2, "mean"), atol=1e-4, rtol=1e-4)

    print("KERNEL_OK")
</pallas_src>

<mosaic_0001>
module attributes {stable_mosaic.version = 11 : i64} {
  func.func @_rev_sce_kernel(%arg0: i32, %arg1: memref<8x32xf32, #tpu.memory_space<vmem>>, %arg2: memref<8x32xf32, #tpu.memory_space<vmem>>, %arg3: memref<8x1xf32, #tpu.memory_space<vmem>>) attributes {dimension_semantics = [#tpu.dimension_semantics<parallel>], iteration_bounds = array<i64: 1>, scalar_prefetch = 0 : i64, scratch_operands = 0 : i64, tpu.core_type = #tpu.core_type<tc>, window_params = [{transform_indices = @transform_0, window_bounds = array<i64: 8, 32>}, {transform_indices = @transform_1, window_bounds = array<i64: 8, 32>}, {transform_indices = @transform_2, window_bounds = array<i64: 8, 1>}]} {
    %c0 = arith.constant 0 : index
    %c0_0 = arith.constant 0 : index
    %0 = vector.load %arg1[%c0, %c0_0] : memref<8x32xf32, #tpu.memory_space<vmem>>, vector<8x32xf32>
    %cst = arith.constant dense<0xFF800000> : vector<8xf32>
    %1 = vector.multi_reduction <maximumf>, %0, %cst [1] : vector<8x32xf32> to vector<8xf32>
    %2 = vector.shape_cast %1 : vector<8xf32> to vector<8x1xf32>
    %3 = vector.broadcast %2 : vector<8x1xf32> to vector<8x32xf32>
    %4 = arith.subf %0, %3 : vector<8x32xf32>
    %5 = math.exp %4 : vector<8x32xf32>
    %cst_1 = arith.constant dense<0.000000e+00> : vector<8xf32>
    %6 = vector.multi_reduction <add>, %5, %cst_1 [1] : vector<8x32xf32> to vector<8xf32>
    %7 = vector.shape_cast %6 : vector<8xf32> to vector<8x1xf32>
    %8 = tpu.reciprocal %7 {approx = true} : vector<8x1xf32> -> vector<8x1xf32>
    %9 = arith.mulf %7, %8 : vector<8x1xf32>
    %cst_2 = arith.constant 2.000000e+00 : f32
    %10 = vector.broadcast %cst_2 : f32 to vector<8x1xf32>
    %11 = arith.subf %10, %9 : vector<8x1xf32>
    %12 = arith.mulf %8, %11 : vector<8x1xf32>
    %13 = vector.broadcast %12 : vector<8x1xf32> to vector<8x32xf32>
    %14 = arith.mulf %5, %13 : vector<8x32xf32>
    %cst_3 = arith.constant 1.000000e-07 : f32
    %15 = vector.broadcast %cst_3 : f32 to vector<8x32xf32>
    %16 = arith.maximumf %14, %15 : vector<8x32xf32>
    %c0_4 = arith.constant 0 : index
    %c0_5 = arith.constant 0 : index
    %17 = vector.load %arg2[%c0_4, %c0_5] : memref<8x32xf32, #tpu.memory_space<vmem>>, vector<8x32xf32>
    %cst_6 = arith.constant 9.99999974E-5 : f32
    %cst_7 = arith.constant 1.000000e+00 : f32
    %18 = vector.broadcast %cst_6 : f32 to vector<8x32xf32>
    %19 = arith.maximumf %18, %17 : vector<8x32xf32>
    %20 = vector.broadcast %cst_7 : f32 to vector<8x32xf32>
    %21 = arith.minimumf %20, %19 : vector<8x32xf32>
    %22 = math.log %21 : vector<8x32xf32>
    %23 = arith.mulf %22, %16 : vector<8x32xf32>
    %cst_8 = arith.constant dense<0.000000e+00> : vector<8xf32>
    %24 = vector.multi_reduction <add>, %23, %cst_8 [1] : vector<8x32xf32> to vector<8xf32>
    %25 = vector.shape_cast %24 : vector<8xf32> to vector<8x1xf32>
    %cst_9 = arith.constant 0.000000e+00 : f32
    %26 = vector.broadcast %cst_9 : f32 to vector<8x1xf32>
    %27 = arith.subf %26, %25 : vector<8x1xf32>
    %c0_10 = arith.constant 0 : index
    %c0_11 = arith.constant 0 : index
    %28 = vector.load %arg3[%c0_10, %c0_11] : memref<8x1xf32, #tpu.memory_space<vmem>>, vector<8x1xf32>
    tpu.vector_store %arg3[%c0_10, %c0_11], %27 {strides = array<i32>} : memref<8x1xf32, #tpu.memory_space<vmem>>, vector<8x1xf32>,
    return
  }
  func.func @transform_0(%arg0: i32) -> (i32, i32) {
    %c0_i32 = arith.constant 0 : i32
    %c0_i32_0 = arith.constant 0 : i32
    return %arg0, %c0_i32 : i32, i32
  }
  func.func @transform_1(%arg0: i32) -> (i32, i32) {
    %c0_i32 = arith.constant 0 : i32
    %c0_i32_0 = arith.constant 0 : i32
    return %arg0, %c0_i32 : i32, i32
  }
  func.func @transform_2(%arg0: i32) -> (i32, i32) {
    %c0_i32 = arith.constant 0 : i32
    %c0_i32_0 = arith.constant 0 : i32
    return %arg0, %c0_i32 : i32, i32
  }
}

</mosaic_0001>

<llo_original>
// kernel: reverse_soft_target_cross_entropy.1
$region0: #{reverse_soft_target_cross_entropy.1}
  #allocation0 [shape = 'u32[]', space=smem, size = 0x4, offset = 0x4, fixed_abs, tag = 'smem constant byte address 0x4 - core index']
  #allocation1 [shape = 'u32[144,128]{1,0:T(1,128)}', space=vmem, size = 0x12000, scoped, tag = 'internal scratch']
  %s0 = inlined_call_operand.hbm [shape: f32[8,32], index: 0, kind: input, shape index: {}]
  %s1 = inlined_call_operand.hbm [shape: f32[8,32], index: 1, kind: input, shape index: {}]
  %s2 = inlined_call_operand.vmem [shape: f32[8,1], index: 2, kind: output, shape index: {}]
  %s3 = sld [smem:[#allocation0]]
  $region26: #{reverse_soft_target_cross_entropy.1} parent=0
    _
  %s5 = ssub.s32 1, %s3
  %s6 = scalar_select 0, %s5, %s3
  $region1: #{reverse_soft_target_cross_entropy.1} parent=0
    #allocation2 [shape = 'u8[4096]{0}', space=vmem, size = 0x1000, scoped, tag = 'input window, operand 0, single buffered']
    #allocation3 [shape = 's32[1]{0}', space=sflag, size = 0x4, scoped, tag = 'scoped memory for reverse_soft_target_cross_entropy.1']
    #allocation4 [shape = 'u8[4096]{0}', space=vmem, size = 0x1000, scoped, tag = 'input window, operand 1, single buffered']
    #allocation5 [shape = 's32[1]{0}', space=sflag, size = 0x4, scoped, tag = 'scoped memory for reverse_soft_target_cross_entropy.1']
    %7 = vsyncpa [#allocation3], 0
    %8 = vsyncpa [#allocation5], 0
    // Predicated region
    $region2: #{reverse_soft_target_cross_entropy.1} parent=1 // pred_check
      _
    $region3: #{reverse_soft_target_cross_entropy.1} parent=1 // pred_check_branch
      %10 = sbr.rel (0) target = $region5
    $region4: #{reverse_soft_target_cross_entropy.1} parent=1 // pred_region
      %s12 = ssub.s32 128, 128
      %13 = vsyncadd [#allocation3], %s12
      %s15 = sshll.u32 [#allocation2], 4
      %s16 = int_to_ptr.vmem [resolvable:$true] %s15
      %18 = dma.hbm_to_vmem [thread:$0]  %s0, 128, %s16, [#allocation3]
    $region5: #{reverse_soft_target_cross_entropy.1} parent=1 // pred_fallthru
      _
    // Predicated region
    $region6: #{reverse_soft_target_cross_entropy.1} parent=1 // pred_check
      _
    $region7: #{reverse_soft_target_cross_entropy.1} parent=1 // pred_check_branch
      %20 = sbr.rel (0) target = $region9
    $region8: #{reverse_soft_target_cross_entropy.1} parent=1 // pred_region
      %s22 = ssub.s32 128, 128
      %23 = vsyncadd [#allocation5], %s22
      %s25 = sshll.u32 [#allocation4], 4
      %s26 = int_to_ptr.vmem [resolvable:$true] %s25
      %28 = dma.hbm_to_vmem [thread:$0]  %s1, 128, %s26, [#allocation5]
    $region9: #{reverse_soft_target_cross_entropy.1} parent=1 // pred_fallthru
      _
    // Predicated region
    $region10: #{reverse_soft_target_cross_entropy.1} parent=1 // pred_check
      _
    $region11: #{reverse_soft_target_cross_entropy.1} parent=1 // pred_check_branch
      %30 = sbr.rel (0) target = $region13
    $region12: #{reverse_soft_target_cross_entropy.1} parent=1 // pred_region
      %31 = dma.done [#allocation3], 128
    $region13: #{reverse_soft_target_cross_entropy.1} parent=1 // pred_fallthru
      _
    // Predicated region
    $region14: #{reverse_soft_target_cross_entropy.1} parent=1 // pred_check
      _
    $region15: #{reverse_soft_target_cross_entropy.1} parent=1 // pred_check_branch
      %33 = sbr.rel (0) target = $region17
    $region16: #{reverse_soft_target_cross_entropy.1} parent=1 // pred_region
      %34 = dma.done [#allocation5], 128
    $region17: #{reverse_soft_target_cross_entropy.1} parent=1 // pred_fallthru
      _
    %v35 = vld [vmem:[#allocation2] sm:$0xff]
    %vm36 = vcmask 261120
    %v37 = vsel %vm36, %v35, -inf
    %38 = vmax.xlane.f32.xlu0 %v37
    %v39 = vpop.xlane.xlu0 %38
    %v40 = vsub.f32 %v35, %v39
    %v41 = vmul.f32 %v40, 1.442695
    %v42 = vpow.pop %v41
    %v43 = vsel %vm36, %v42, 0.0
    %44 = vadd.xlane.f32.xlu0 %v43
    %v45 = vpop.xlane.xlu0 %44
    %v46 = vrcp.pop %v45
    %v47 = vmul.f32 %v45, %v46
    %v48 = vsub.f32 2.0, %v47
    %v49 = vmul.f32 %v46, %v48
    %v50 = vmul.f32 %v42, %v49
    %v51 = vmax.f32 %v50, 1e-07
    %v52 = vld [vmem:[#allocation4] sm:$0xff]
    %v53 = vmax.f32 %v52, 0.0001
    %v54 = vmin.f32 %v53, 1.0
    %v55 = vlog2.pop %v54
    %v56 = vmul.f32 %v55, 0.6931472
    %v57 = vmul.f32 %v56, %v51
    %v58 = vsel %vm36, %v57, 0.0
    %59 = vadd.xlane.f32.xlu0 %v58
    %v60 = vpop.xlane.xlu0 %59
    %v61 = vsub.f32 0.0, %v60
    %vm62 = vcmask 7168
    %63 = vst.msk [vmem:[%s2] sm:$0xff] %vm62, %v61
    // Predicated region
    $region18: #{reverse_soft_target_cross_entropy.1} parent=1 // pred_check
      _
    $region19: #{reverse_soft_target_cross_entropy.1} parent=1 // pred_check_branch
      %65 = sbr.rel (0) target = $region21
    $region20: #{reverse_soft_target_cross_entropy.1} parent=1 // pred_region
      _
    $region21: #{reverse_soft_target_cross_entropy.1} parent=1 // pred_fallthru
      _
    // Predicated region
    $region22: #{reverse_soft_target_cross_entropy.1} parent=1 // pred_check
      _
    $region23: #{reverse_soft_target_cross_entropy.1} parent=1 // pred_check_branch
      %67 = sbr.rel (0) target = $region25
    $region24: #{reverse_soft_target_cross_entropy.1} parent=1 // pred_region
      _
    $region25: #{reverse_soft_target_cross_entropy.1} parent=1 // pred_fallthru
      _
    %68 = vsyncpa [#allocation3], 1
    %69 = vsyncpa [#allocation5], 1

</llo_original>
